<compile_context>
chip_gen: v7x
topology: tpu7x:2x2x1
jax: 0.10.0
libtpu: 0.0.40
codegen_flags: <defaults>
</compile_context>

<pallas_src>
import jax
import jax.numpy as jnp
from jax.experimental import pallas as pl
from jax.experimental.pallas import tpu as pltpu


def _round_up(n, m):
    return ((n + m - 1) // m) * m


def _classifier_kernel(x_ref, w1_ref, b1_ref, w2_ref, b2_ref, out_ref):
    """One batch tile.

    x_ref:   (TB, D)    bfloat16
    w1_ref:  (D, H)     bfloat16   (VMEM-resident across the grid)
    b1_ref:  (1, H)     float32
    w2_ref:  (H, O)     float32
    b2_ref:  (1, O)     float32
    out_ref: (TB, 3*O)  float32    -- [sigmoid | softmax | fc2] packed on lanes
    """
    O = b2_ref.shape[1]

    # fc1 + relu: bf16 MXU matmul, f32 accumulation.
    h = jnp.dot(x_ref[...], w1_ref[...], preferred_element_type=jnp.float32)
    h = jnp.maximum(h + b1_ref[...], 0.0)

    # fc2 (small H contraction, f32).
    fc2 = jnp.dot(h, w2_ref[...], preferred_element_type=jnp.float32) + b2_ref[...]

    # sigmoid
    sig = 1.0 / (1.0 + jnp.exp(-fc2))

    # softmax over dim=1 applied to the sigmoid output (matches the PyTorch
    # module). sigmoid output is bounded in (0,1) -> exp is safe without the
    # usual max-subtraction (saves one cross-lane reduce).
    e = jnp.exp(sig)
    probs = e * pl.reciprocal(jnp.sum(e, axis=1, keepdims=True), approx=False)

    # Consolidated output slab: one writeback per tile.
    out_ref[:, 0:O] = sig
    out_ref[:, O:2 * O] = probs
    out_ref[:, 2 * O:3 * O] = fc2


def classifier_forward(x_nchw, w1, b1, w2, b2):
    """x_nchw: (B, C, H, W) float32. Weights stored as (in, out) so the kernel
    computes x @ W + b (== PyTorch's x @ W.T with its (out, in) layout).
    Returns (sigmoid(fc2), softmax(sigmoid(fc2)), fc2), all float32."""
    B = x_nchw.shape[0]
    x2d = x_nchw.reshape(B, -1)            # torch.flatten(x, 1)
    D = x2d.shape[1]
    H = w1.shape[1]
    O = w2.shape[1]

    # Batch tile: sublane-aligned for tiny B; 128-row tiles for larger B
    # (MXU-friendly on v5e, fine on v6e/v7x), pipelined over a "parallel" axis.
    TB = 128 if B >= 128 else _round_up(B, 8)
    Bp = _round_up(B, TB)
    if Bp != B:
        x2d = jnp.pad(x2d, ((0, Bp - B), (0, 0)))

    # bf16 inputs for the large contraction; everything else stays f32.
    x_bf16 = x2d.astype(jnp.bfloat16)
    w1_bf16 = w1.astype(jnp.bfloat16)
    b1_2d = b1.reshape(1, H).astype(jnp.float32)
    w2_f32 = w2.astype(jnp.float32)
    b2_2d = b2.reshape(1, O).astype(jnp.float32)

    slab = pl.pallas_call(
        _classifier_kernel,
        out_shape=jax.ShapeDtypeStruct((Bp, 3 * O), jnp.float32),
        grid=(Bp // TB,),
        in_specs=[
            pl.BlockSpec((TB, D), lambda i: (i, 0)),   # x: tiled over batch
            pl.BlockSpec((D, H), lambda i: (0, 0)),    # w1: resident
            pl.BlockSpec((1, H), lambda i: (0, 0)),    # b1: resident
            pl.BlockSpec((H, O), lambda i: (0, 0)),    # w2: resident
            pl.BlockSpec((1, O), lambda i: (0, 0)),    # b2: resident
        ],
        out_specs=pl.BlockSpec((TB, 3 * O), lambda i: (i, 0)),
        compiler_params=pltpu.CompilerParams(
            dimension_semantics=("parallel",)),
    )(x_bf16, w1_bf16, b1_2d, w2_f32, b2_2d)

    sig = slab[:B, 0:O]
    probs = slab[:B, O:2 * O]
    fc2 = slab[:B, 2 * O:3 * O]
    return sig, probs, fc2


if __name__ == "__main__":
    # Small shapes consistent with the module:
    #   x: (B=2, C=4, H=16, W=16) -> n_inputs = 4*16*16 = 1024
    #   args.numneurons = 32 (hidden), n_outputs = 16
    B, C, Hs, Ws = 2, 4, 16, 16
    n_inputs = C * Hs * Ws
    numneurons = 32
    n_outputs = 16

    key = jax.random.PRNGKey(0)
    kx, kw1, kb1, kw2, kb2 = jax.random.split(key, 5)

    x = jax.random.normal(kx, (B, C, Hs, Ws), dtype=jnp.float32)
    w1 = jax.random.normal(kw1, (n_inputs, numneurons), dtype=jnp.float32) * 0.02
    b1 = jax.random.normal(kb1, (numneurons,), dtype=jnp.float32) * 0.02
    w2 = jax.random.normal(kw2, (numneurons, n_outputs), dtype=jnp.float32) * 0.02
    b2 = jax.random.normal(kb2, (n_outputs,), dtype=jnp.float32) * 0.02

    sig, probs, fc2 = classifier_forward(x, w1, b1, w2, b2)
    jax.block_until_ready((sig, probs, fc2))

    # Sanity check against a pure-JAX reference that uses the same bf16 cast
    # for the fc1 contraction (f32 accumulation), plus f32 everywhere else.
    x2d = x.reshape(B, -1)
    h_ref = jnp.maximum(
        jnp.dot(x2d.astype(jnp.bfloat16), w1.astype(jnp.bfloat16),
                preferred_element_type=jnp.float32) + b1, 0.0)
    fc2_ref = h_ref @ w2 + b2
    sig_ref = jax.nn.sigmoid(fc2_ref)
    probs_ref = jax.nn.softmax(sig_ref, axis=1)

    assert jnp.allclose(fc2, fc2_ref, atol=2e-3, rtol=2e-3)
    assert jnp.allclose(sig, sig_ref, atol=1e-3)
    assert jnp.allclose(probs, probs_ref, atol=1e-3)

    print("KERNEL_OK")
</pallas_src>

<mosaic_0001>
module attributes {stable_mosaic.version = 11 : i64} {
  func.func @_classifier_kernel(%arg0: i32, %arg1: memref<8x1024xbf16, #tpu.memory_space<vmem>>, %arg2: memref<1024x32xbf16, #tpu.memory_space<vmem>>, %arg3: memref<1x32xf32, #tpu.memory_space<vmem>>, %arg4: memref<32x16xf32, #tpu.memory_space<vmem>>, %arg5: memref<1x16xf32, #tpu.memory_space<vmem>>, %arg6: memref<8x48xf32, #tpu.memory_space<vmem>>) attributes {dimension_semantics = [#tpu.dimension_semantics<parallel>], iteration_bounds = array<i64: 1>, scalar_prefetch = 0 : i64, scratch_operands = 0 : i64, tpu.core_type = #tpu.core_type<tc>, window_params = [{transform_indices = @transform_0, window_bounds = array<i64: 8, 1024>}, {pipeline_mode = #tpu.pipeline_mode<synchronous>, transform_indices = @transform_1, window_bounds = array<i64: 1024, 32>}, {pipeline_mode = #tpu.pipeline_mode<synchronous>, transform_indices = @transform_2, window_bounds = array<i64: 1, 32>}, {pipeline_mode = #tpu.pipeline_mode<synchronous>, transform_indices = @transform_3, window_bounds = array<i64: 32, 16>}, {pipeline_mode = #tpu.pipeline_mode<synchronous>, transform_indices = @transform_4, window_bounds = array<i64: 1, 16>}, {transform_indices = @transform_5, window_bounds = array<i64: 8, 48>}]} {
    %c0 = arith.constant 0 : index
    %c0_0 = arith.constant 0 : index
    %0 = vector.load %arg1[%c0, %c0_0] : memref<8x1024xbf16, #tpu.memory_space<vmem>>, vector<8x1024xbf16>
    %c0_1 = arith.constant 0 : index
    %c0_2 = arith.constant 0 : index
    %1 = vector.load %arg2[%c0_1, %c0_2] : memref<1024x32xbf16, #tpu.memory_space<vmem>>, vector<1024x32xbf16>
    %cst = arith.constant dense<0.000000e+00> : vector<8x32xf32>
    %2 = tpu.matmul %0, %1, %cst {dimension_numbers = #tpu.dot_dimension_numbers<[1], [0], [0], [1], [0, 0, 1, 1], [], []>} : vector<8x1024xbf16>, vector<1024x32xbf16>, vector<8x32xf32> -> vector<8x32xf32>
    %c0_3 = arith.constant 0 : index
    %c0_4 = arith.constant 0 : index
    %3 = vector.load %arg3[%c0_3, %c0_4] : memref<1x32xf32, #tpu.memory_space<vmem>>, vector<1x32xf32>
    %4 = vector.broadcast %3 : vector<1x32xf32> to vector<8x32xf32>
    %5 = arith.addf %2, %4 : vector<8x32xf32>
    %cst_5 = arith.constant 0.000000e+00 : f32
    %6 = vector.broadcast %cst_5 : f32 to vector<8x32xf32>
    %7 = arith.maximumf %5, %6 : vector<8x32xf32>
    %c0_6 = arith.constant 0 : index
    %c0_7 = arith.constant 0 : index
    %8 = vector.load %arg4[%c0_6, %c0_7] : memref<32x16xf32, #tpu.memory_space<vmem>>, vector<32x16xf32>
    %cst_8 = arith.constant dense<0.000000e+00> : vector<8x16xf32>
    %9 = tpu.matmul %7, %8, %cst_8 {dimension_numbers = #tpu.dot_dimension_numbers<[1], [0], [0], [1], [0, 0, 1, 1], [], []>} : vector<8x32xf32>, vector<32x16xf32>, vector<8x16xf32> -> vector<8x16xf32>
    %c0_9 = arith.constant 0 : index
    %c0_10 = arith.constant 0 : index
    %10 = vector.load %arg5[%c0_9, %c0_10] : memref<1x16xf32, #tpu.memory_space<vmem>>, vector<1x16xf32>
    %11 = vector.broadcast %10 : vector<1x16xf32> to vector<8x16xf32>
    %12 = arith.addf %9, %11 : vector<8x16xf32>
    %cst_11 = arith.constant 0.000000e+00 : f32
    %13 = vector.broadcast %cst_11 : f32 to vector<8x16xf32>
    %14 = arith.subf %13, %12 : vector<8x16xf32>
    %15 = math.exp %14 : vector<8x16xf32>
    %cst_12 = arith.constant 1.000000e+00 : f32
    %16 = vector.broadcast %cst_12 : f32 to vector<8x16xf32>
    %17 = arith.addf %16, %15 : vector<8x16xf32>
    %cst_13 = arith.constant 1.000000e+00 : f32
    %18 = vector.broadcast %cst_13 : f32 to vector<8x16xf32>
    %19 = arith.divf %18, %17 : vector<8x16xf32>
    %20 = math.exp %19 : vector<8x16xf32>
    %cst_14 = arith.constant dense<0.000000e+00> : vector<8xf32>
    %21 = vector.multi_reduction <add>, %20, %cst_14 [1] : vector<8x16xf32> to vector<8xf32>
    %22 = vector.shape_cast %21 : vector<8xf32> to vector<8x1xf32>
    %23 = tpu.reciprocal %22 : vector<8x1xf32> -> vector<8x1xf32>
    %24 = vector.broadcast %23 : vector<8x1xf32> to vector<8x16xf32>
    %25 = arith.mulf %20, %24 : vector<8x16xf32>
    %c0_15 = arith.constant 0 : index
    %c0_16 = arith.constant 0 : index
    %26 = vector.load %arg6[%c0_15, %c0_16] : memref<8x48xf32, #tpu.memory_space<vmem>>, vector<8x16xf32>
    tpu.vector_store %arg6[%c0_15, %c0_16], %19 {strides = array<i32>} : memref<8x48xf32, #tpu.memory_space<vmem>>, vector<8x16xf32>,
    %c0_17 = arith.constant 0 : index
    %c16 = arith.constant 16 : index
    %27 = vector.load %arg6[%c0_17, %c16] : memref<8x48xf32, #tpu.memory_space<vmem>>, vector<8x16xf32>
    tpu.vector_store %arg6[%c0_17, %c16], %25 {strides = array<i32>} : memref<8x48xf32, #tpu.memory_space<vmem>>, vector<8x16xf32>,
    %c0_18 = arith.constant 0 : index
    %c32 = arith.constant 32 : index
    %28 = vector.load %arg6[%c0_18, %c32] : memref<8x48xf32, #tpu.memory_space<vmem>>, vector<8x16xf32>
    tpu.vector_store %arg6[%c0_18, %c32], %12 {strides = array<i32>} : memref<8x48xf32, #tpu.memory_space<vmem>>, vector<8x16xf32>,
    return
  }
  func.func @transform_0(%arg0: i32) -> (i32, i32) {
    %c0_i32 = arith.constant 0 : i32
    %c0_i32_0 = arith.constant 0 : i32
    return %arg0, %c0_i32 : i32, i32
  }
  func.func @transform_1(%arg0: i32) -> (i32, i32) {
    %c0_i32 = arith.constant 0 : i32
    %c0_i32_0 = arith.constant 0 : i32
    %c0_i32_1 = arith.constant 0 : i32
    return %c0_i32, %c0_i32_0 : i32, i32
  }
  func.func @transform_2(%arg0: i32) -> (i32, i32) {
    %c0_i32 = arith.constant 0 : i32
    %c0_i32_0 = arith.constant 0 : i32
    %c0_i32_1 = arith.constant 0 : i32
    return %c0_i32, %c0_i32_0 : i32, i32
  }
  func.func @transform_3(%arg0: i32) -> (i32, i32) {
    %c0_i32 = arith.constant 0 : i32
    %c0_i32_0 = arith.constant 0 : i32
    %c0_i32_1 = arith.constant 0 : i32
    return %c0_i32, %c0_i32_0 : i32, i32
  }
  func.func @transform_4(%arg0: i32) -> (i32, i32) {
    %c0_i32 = arith.constant 0 : i32
    %c0_i32_0 = arith.constant 0 : i32
    %c0_i32_1 = arith.constant 0 : i32
    return %c0_i32, %c0_i32_0 : i32, i32
  }
  func.func @transform_5(%arg0: i32) -> (i32, i32) {
    %c0_i32 = arith.constant 0 : i32
    %c0_i32_0 = arith.constant 0 : i32
    return %arg0, %c0_i32 : i32, i32
  }
}

</mosaic_0001>

<llo_original>
// kernel: tpu_custom_call.1
$region0: #{tpu_custom_call.1}
  #allocation0 [shape = 'u32[]', space=smem, size = 0x4, offset = 0x4, fixed_abs, tag = 'smem constant byte address 0x4 - core index']
  #allocation1 [shape = 'u32[144,128]{1,0:T(1,128)}', space=vmem, size = 0x12000, scoped, tag = 'internal scratch']
  %s0 = inlined_call_operand.vmem [shape: bf16[8,1024], index: 0, kind: input, shape index: {}]
  %s1 = inlined_call_operand.vmem [shape: bf16[1024,32], index: 1, kind: input, shape index: {}]
  %s2 = inlined_call_operand.vmem [shape: f32[1,32], index: 2, kind: input, shape index: {}]
  %s3 = inlined_call_operand.vmem [shape: f32[32,16], index: 3, kind: input, shape index: {}]
  %s4 = inlined_call_operand.vmem [shape: f32[1,16], index: 4, kind: input, shape index: {}]
  %s5 = inlined_call_operand.hbm [shape: f32[8,48], index: 5, kind: output, shape index: {}]
  %s6 = sld [smem:[#allocation0]]
  $region30: #{tpu_custom_call.1} parent=0
    _
  %s8 = ssub.s32 1, %s6
  %s9 = scalar_select 0, %s8, %s6
  $region1: #{tpu_custom_call.1} parent=0
    #allocation2 [shape = 'u8[4096]{0}', space=vmem, size = 0x1000, scoped, tag = 'output window, operand 0, single buffered']
    #allocation3 [shape = 's32[1]{0}', space=sflag, size = 0x4, scoped, tag = 'scoped memory for tpu_custom_call.1']
    %10 = vsyncpa [#allocation3], 0
    // Predicated region
    $region2: #{tpu_custom_call.1} parent=1 // pred_check
      _
    $region3: #{tpu_custom_call.1} parent=1 // pred_check_branch
      %12 = sbr.rel (0) target = $region5
    $region4: #{tpu_custom_call.1} parent=1 // pred_region
      _
    $region5: #{tpu_custom_call.1} parent=1 // pred_fallthru
      _
    // Predicated region
    $region6: #{tpu_custom_call.1} parent=1 // pred_check
      _
    $region7: #{tpu_custom_call.1} parent=1 // pred_check_branch
      %14 = sbr.rel (0) target = $region9
    $region8: #{tpu_custom_call.1} parent=1 // pred_region
      _
    $region9: #{tpu_custom_call.1} parent=1 // pred_fallthru
      _
    // Predicated region
    $region10: #{tpu_custom_call.1} parent=1 // pred_check
      _
    $region11: #{tpu_custom_call.1} parent=1 // pred_check_branch
      %16 = sbr.rel (0) target = $region13
    $region12: #{tpu_custom_call.1} parent=1 // pred_region
      _
    $region13: #{tpu_custom_call.1} parent=1 // pred_fallthru
      _
    // Predicated region
    $region14: #{tpu_custom_call.1} parent=1 // pred_check
      _
    $region15: #{tpu_custom_call.1} parent=1 // pred_check_branch
      %18 = sbr.rel (0) target = $region17
    $region16: #{tpu_custom_call.1} parent=1 // pred_region
      _
    $region17: #{tpu_custom_call.1} parent=1 // pred_fallthru
      _
    // Predicated region
    $region18: #{tpu_custom_call.1} parent=1 // pred_check
      _
    $region19: #{tpu_custom_call.1} parent=1 // pred_check_branch
      %20 = sbr.rel (0) target = $region21
    $region20: #{tpu_custom_call.1} parent=1 // pred_region
      _
    $region21: #{tpu_custom_call.1} parent=1 // pred_fallthru
      _
    %v22 = vld [vmem:[%s0] sm:$0xff]
    %v23 = vld [vmem:[%s0 + $0x8] sm:$0xff]
    %v24 = vld [vmem:[%s0 + $0x10] sm:$0xff]
    %v25 = vld [vmem:[%s0 + $0x18] sm:$0xff]
    %v26 = vld [vmem:[%s1] sm:$0xf]
    %v27 = vld [vmem:[%s1 + $0x4] sm:$0xf]
    %v28 = vld [vmem:[%s1 + $0x8] sm:$0xf]
    %v29 = vld [vmem:[%s1 + $0xc] sm:$0xf]
    %v30 = vld [vmem:[%s1 + $0x10] sm:$0xf]
    %v31 = vld [vmem:[%s1 + $0x14] sm:$0xf]
    %v32 = vld [vmem:[%s1 + $0x18] sm:$0xf]
    %v33 = vld [vmem:[%s1 + $0x1c] sm:$0xf]
    %v34 = vld [vmem:[%s1 + $0x20] sm:$0xf]
    %v35 = vld [vmem:[%s1 + $0x24] sm:$0xf]
    %v36 = vld [vmem:[%s1 + $0x28] sm:$0xf]
    %v37 = vld [vmem:[%s1 + $0x2c] sm:$0xf]
    %v38 = vld [vmem:[%s1 + $0x30] sm:$0xf]
    %v39 = vld [vmem:[%s1 + $0x34] sm:$0xf]
    %v40 = vld [vmem:[%s1 + $0x38] sm:$0xf]
    %v41 = vld [vmem:[%s1 + $0x3c] sm:$0xf]
    %v42 = vld [vmem:[%s1 + $0x40] sm:$0xf]
    %v43 = vld [vmem:[%s1 + $0x44] sm:$0xf]
    %v44 = vld [vmem:[%s1 + $0x48] sm:$0xf]
    %v45 = vld [vmem:[%s1 + $0x4c] sm:$0xf]
    %v46 = vld [vmem:[%s1 + $0x50] sm:$0xf]
    %v47 = vld [vmem:[%s1 + $0x54] sm:$0xf]
    %v48 = vld [vmem:[%s1 + $0x58] sm:$0xf]
    %v49 = vld [vmem:[%s1 + $0x5c] sm:$0xf]
    %v50 = vld [vmem:[%s1 + $0x60] sm:$0xf]
    %v51 = vld [vmem:[%s1 + $0x64] sm:$0xf]
    %v52 = vld [vmem:[%s1 + $0x68] sm:$0xf]
    %v53 = vld [vmem:[%s1 + $0x6c] sm:$0xf]
    %v54 = vld [vmem:[%s1 + $0x70] sm:$0xf]
    %v55 = vld [vmem:[%s1 + $0x74] sm:$0xf]
    %v56 = vld [vmem:[%s1 + $0x78] sm:$0xf]
    %v57 = vld [vmem:[%s1 + $0x7c] sm:$0xf]
    %v58 = vld [vmem:[%s1 + $0x80] sm:$0xf]
    %v59 = vld [vmem:[%s1 + $0x84] sm:$0xf]
    %v60 = vld [vmem:[%s1 + $0x88] sm:$0xf]
    %v61 = vld [vmem:[%s1 + $0x8c] sm:$0xf]
    %v62 = vld [vmem:[%s1 + $0x90] sm:$0xf]
    %v63 = vld [vmem:[%s1 + $0x94] sm:$0xf]
    %v64 = vld [vmem:[%s1 + $0x98] sm:$0xf]
    %v65 = vld [vmem:[%s1 + $0x9c] sm:$0xf]
    %v66 = vld [vmem:[%s1 + $0xa0] sm:$0xf]
    %v67 = vld [vmem:[%s1 + $0xa4] sm:$0xf]
    %v68 = vld [vmem:[%s1 + $0xa8] sm:$0xf]
    %v69 = vld [vmem:[%s1 + $0xac] sm:$0xf]
    %v70 = vld [vmem:[%s1 + $0xb0] sm:$0xf]
    %v71 = vld [vmem:[%s1 + $0xb4] sm:$0xf]
    %v72 = vld [vmem:[%s1 + $0xb8] sm:$0xf]
    %v73 = vld [vmem:[%s1 + $0xbc] sm:$0xf]
    %v74 = vld [vmem:[%s1 + $0xc0] sm:$0xf]
    %v75 = vld [vmem:[%s1 + $0xc4] sm:$0xf]
    %v76 = vld [vmem:[%s1 + $0xc8] sm:$0xf]
    %v77 = vld [vmem:[%s1 + $0xcc] sm:$0xf]
    %v78 = vld [vmem:[%s1 + $0xd0] sm:$0xf]
    %v79 = vld [vmem:[%s1 + $0xd4] sm:$0xf]
    %v80 = vld [vmem:[%s1 + $0xd8] sm:$0xf]
    %v81 = vld [vmem:[%s1 + $0xdc] sm:$0xf]
    %v82 = vld [vmem:[%s1 + $0xe0] sm:$0xf]
    %v83 = vld [vmem:[%s1 + $0xe4] sm:$0xf]
    %v84 = vld [vmem:[%s1 + $0xe8] sm:$0xf]
    %v85 = vld [vmem:[%s1 + $0xec] sm:$0xf]
    %v86 = vld [vmem:[%s1 + $0xf0] sm:$0xf]
    %v87 = vld [vmem:[%s1 + $0xf4] sm:$0xf]
    %v88 = vld [vmem:[%s1 + $0xf8] sm:$0xf]
    %v89 = vld [vmem:[%s1 + $0xfc] sm:$0xf]
    %v90 = vld [vmem:[%s1 + $0x100] sm:$0xf]
    %v91 = vld [vmem:[%s1 + $0x104] sm:$0xf]
    %v92 = vld [vmem:[%s1 + $0x108] sm:$0xf]
    %v93 = vld [vmem:[%s1 + $0x10c] sm:$0xf]
    %v94 = vld [vmem:[%s1 + $0x110] sm:$0xf]
    %v95 = vld [vmem:[%s1 + $0x114] sm:$0xf]
    %v96 = vld [vmem:[%s1 + $0x118] sm:$0xf]
    %v97 = vld [vmem:[%s1 + $0x11c] sm:$0xf]
    %v98 = vld [vmem:[%s1 + $0x120] sm:$0xf]
    %v99 = vld [vmem:[%s1 + $0x124] sm:$0xf]
    %v100 = vld [vmem:[%s1 + $0x128] sm:$0xf]
    %v101 = vld [vmem:[%s1 + $0x12c] sm:$0xf]
    %v102 = vld [vmem:[%s1 + $0x130] sm:$0xf]
    %v103 = vld [vmem:[%s1 + $0x134] sm:$0xf]
    %v104 = vld [vmem:[%s1 + $0x138] sm:$0xf]
    %v105 = vld [vmem:[%s1 + $0x13c] sm:$0xf]
    %v106 = vld [vmem:[%s1 + $0x140] sm:$0xf]
    %v107 = vld [vmem:[%s1 + $0x144] sm:$0xf]
    %v108 = vld [vmem:[%s1 + $0x148] sm:$0xf]
    %v109 = vld [vmem:[%s1 + $0x14c] sm:$0xf]
    %v110 = vld [vmem:[%s1 + $0x150] sm:$0xf]
    %v111 = vld [vmem:[%s1 + $0x154] sm:$0xf]
    %v112 = vld [vmem:[%s1 + $0x158] sm:$0xf]
    %v113 = vld [vmem:[%s1 + $0x15c] sm:$0xf]
    %v114 = vld [vmem:[%s1 + $0x160] sm:$0xf]
    %v115 = vld [vmem:[%s1 + $0x164] sm:$0xf]
    %v116 = vld [vmem:[%s1 + $0x168] sm:$0xf]
    %v117 = vld [vmem:[%s1 + $0x16c] sm:$0xf]
    %v118 = vld [vmem:[%s1 + $0x170] sm:$0xf]
    %v119 = vld [vmem:[%s1 + $0x174] sm:$0xf]
    %v120 = vld [vmem:[%s1 + $0x178] sm:$0xf]
    %v121 = vld [vmem:[%s1 + $0x17c] sm:$0xf]
    %v122 = vld [vmem:[%s1 + $0x180] sm:$0xf]
    %v123 = vld [vmem:[%s1 + $0x184] sm:$0xf]
    %v124 = vld [vmem:[%s1 + $0x188] sm:$0xf]
    %v125 = vld [vmem:[%s1 + $0x18c] sm:$0xf]
    %v126 = vld [vmem:[%s1 + $0x190] sm:$0xf]
    %v127 = vld [vmem:[%s1 + $0x194] sm:$0xf]
    %v128 = vld [vmem:[%s1 + $0x198] sm:$0xf]
    %v129 = vld [vmem:[%s1 + $0x19c] sm:$0xf]
    %v130 = vld [vmem:[%s1 + $0x1a0] sm:$0xf]
    %v131 = vld [vmem:[%s1 + $0x1a4] sm:$0xf]
    %v132 = vld [vmem:[%s1 + $0x1a8] sm:$0xf]
    %v133 = vld [vmem:[%s1 + $0x1ac] sm:$0xf]
    %v134 = vld [vmem:[%s1 + $0x1b0] sm:$0xf]
    %v135 = vld [vmem:[%s1 + $0x1b4] sm:$0xf]
    %v136 = vld [vmem:[%s1 + $0x1b8] sm:$0xf]
    %v137 = vld [vmem:[%s1 + $0x1bc] sm:$0xf]
    %v138 = vld [vmem:[%s1 + $0x1c0] sm:$0xf]
    %v139 = vld [vmem:[%s1 + $0x1c4] sm:$0xf]
    %v140 = vld [vmem:[%s1 + $0x1c8] sm:$0xf]
    %v141 = vld [vmem:[%s1 + $0x1cc] sm:$0xf]
    %v142 = vld [vmem:[%s1 + $0x1d0] sm:$0xf]
    %v143 = vld [vmem:[%s1 + $0x1d4] sm:$0xf]
    %v144 = vld [vmem:[%s1 + $0x1d8] sm:$0xf]
    %v145 = vld [vmem:[%s1 + $0x1dc] sm:$0xf]
    %v146 = vld [vmem:[%s1 + $0x1e0] sm:$0xf]
    %v147 = vld [vmem:[%s1 + $0x1e4] sm:$0xf]
    %v148 = vld [vmem:[%s1 + $0x1e8] sm:$0xf]
    %v149 = vld [vmem:[%s1 + $0x1ec] sm:$0xf]
    %v150 = vld [vmem:[%s1 + $0x1f0] sm:$0xf]
    %v151 = vld [vmem:[%s1 + $0x1f4] sm:$0xf]
    %v152 = vld [vmem:[%s1 + $0x1f8] sm:$0xf]
    %v153 = vld [vmem:[%s1 + $0x1fc] sm:$0xf]
    %v154 = vld [vmem:[%s2] sm:$0x1]
    %v156 = vlaneseq
    %v157 = vshrl.u32 %v156, 7
    %v158 = vsub.s32 0, %v157
    %v159 = vrot.slane %v154, %v158
    %v165 = vunpack.c.l.b16 %v22
    %v166 = vunpack.c.h.b16 %v22
    %v167 = vunpack.c.l.b16 %v23
    %v168 = vunpack.c.h.b16 %v23
    %v169 = vunpack.c.l.b16 %v24
    %v170 = vunpack.c.h.b16 %v24
    %v171 = vunpack.c.l.b16 %v25
    %v172 = vunpack.c.h.b16 %v25
    %v173 = vpack.c.b16 %v165, %v165
    %v174 = vpack.c.b16 %v166, %v166
    %v175 = vpack.c.b16 %v167, %v167
    %v176 = vpack.c.b16 %v168, %v168
    %v177 = vpack.c.b16 %v169, %v169
    %v178 = vpack.c.b16 %v170, %v170
    %v179 = vpack.c.b16 %v171, %v171
    %v180 = vpack.c.b16 %v172, %v172
    %v317 = vunpack.c.l.b16 %v26
    %v318 = vunpack.c.l.b16 %v27
    %v319 = vunpack.c.l.b16 %v28
    %v320 = vunpack.c.l.b16 %v29
    %v321 = vunpack.c.l.b16 %v30
    %v322 = vunpack.c.l.b16 %v31
    %v323 = vunpack.c.l.b16 %v32
    %v324 = vunpack.c.l.b16 %v33
    %v325 = vunpack.c.l.b16 %v34
    %v326 = vunpack.c.l.b16 %v35
    %v327 = vunpack.c.l.b16 %v36
    %v328 = vunpack.c.l.b16 %v37
    %v329 = vunpack.c.l.b16 %v38
    %v330 = vunpack.c.l.b16 %v39
    %v331 = vunpack.c.l.b16 %v40
    %v332 = vunpack.c.l.b16 %v41
    %v333 = vunpack.c.l.b16 %v42
    %v334 = vunpack.c.l.b16 %v43
    %v335 = vunpack.c.l.b16 %v44
    %v336 = vunpack.c.l.b16 %v45
    %v337 = vunpack.c.l.b16 %v46
    %v338 = vunpack.c.l.b16 %v47
    %v339 = vunpack.c.l.b16 %v48
    %v340 = vunpack.c.l.b16 %v49
    %v341 = vunpack.c.l.b16 %v50
    %v342 = vunpack.c.l.b16 %v51
    %v343 = vunpack.c.l.b16 %v52
    %v344 = vunpack.c.l.b16 %v53
    %v345 = vunpack.c.l.b16 %v54
    %v346 = vunpack.c.l.b16 %v55
    %v347 = vunpack.c.l.b16 %v56
    %v348 = vunpack.c.l.b16 %v57
    %v349 = vunpack.c.l.b16 %v58
    %v350 = vunpack.c.l.b16 %v59
    %v351 = vunpack.c.l.b16 %v60
    %v352 = vunpack.c.l.b16 %v61
    %v353 = vunpack.c.l.b16 %v62
    %v354 = vunpack.c.l.b16 %v63
    %v355 = vunpack.c.l.b16 %v64
    %v356 = vunpack.c.l.b16 %v65
    %v357 = vunpack.c.l.b16 %v66
    %v358 = vunpack.c.l.b16 %v67
    %v359 = vunpack.c.l.b16 %v68
    %v360 = vunpack.c.l.b16 %v69
    %v361 = vunpack.c.l.b16 %v70
    %v362 = vunpack.c.l.b16 %v71
    %v363 = vunpack.c.l.b16 %v72
    %v364 = vunpack.c.l.b16 %v73
    %v365 = vunpack.c.l.b16 %v74
    %v366 = vunpack.c.l.b16 %v75
    %v367 = vunpack.c.l.b16 %v76
    %v368 = vunpack.c.l.b16 %v77
    %v369 = vunpack.c.l.b16 %v78
    %v370 = vunpack.c.l.b16 %v79
    %v371 = vunpack.c.l.b16 %v80
    %v372 = vunpack.c.l.b16 %v81
    %v373 = vunpack.c.l.b16 %v82
    %v374 = vunpack.c.l.b16 %v83
    %v375 = vunpack.c.l.b16 %v84
    %v376 = vunpack.c.l.b16 %v85
    %v377 = vunpack.c.l.b16 %v86
    %v378 = vunpack.c.l.b16 %v87
    %v379 = vunpack.c.l.b16 %v88
    %v380 = vunpack.c.l.b16 %v89
    %v381 = vunpack.c.l.b16 %v90
    %v382 = vunpack.c.l.b16 %v91
    %v383 = vunpack.c.l.b16 %v92
    %v384 = vunpack.c.l.b16 %v93
    %v385 = vunpack.c.l.b16 %v94
    %v386 = vunpack.c.l.b16 %v95
    %v387 = vunpack.c.l.b16 %v96
    %v388 = vunpack.c.l.b16 %v97
    %v389 = vunpack.c.l.b16 %v98
    %v390 = vunpack.c.l.b16 %v99
    %v391 = vunpack.c.l.b16 %v100
    %v392 = vunpack.c.l.b16 %v101
    %v393 = vunpack.c.l.b16 %v102
    %v394 = vunpack.c.l.b16 %v103
    %v395 = vunpack.c.l.b16 %v104
    %v396 = vunpack.c.l.b16 %v105
    %v397 = vunpack.c.l.b16 %v106
    %v398 = vunpack.c.l.b16 %v107
    %v399 = vunpack.c.l.b16 %v108
    %v400 = vunpack.c.l.b16 %v109
    %v401 = vunpack.c.l.b16 %v110
    %v402 = vunpack.c.l.b16 %v111
    %v403 = vunpack.c.l.b16 %v112
    %v404 = vunpack.c.l.b16 %v113
    %v405 = vunpack.c.l.b16 %v114
    %v406 = vunpack.c.l.b16 %v115
    %v407 = vunpack.c.l.b16 %v116
    %v408 = vunpack.c.l.b16 %v117
    %v409 = vunpack.c.l.b16 %v118
    %v410 = vunpack.c.l.b16 %v119
    %v411 = vunpack.c.l.b16 %v120
    %v412 = vunpack.c.l.b16 %v121
    %v413 = vunpack.c.l.b16 %v122
    %v414 = vunpack.c.l.b16 %v123
    %v415 = vunpack.c.l.b16 %v124
    %v416 = vunpack.c.l.b16 %v125
    %v417 = vunpack.c.l.b16 %v126
    %v418 = vunpack.c.l.b16 %v127
    %v419 = vunpack.c.l.b16 %v128
    %v420 = vunpack.c.l.b16 %v129
    %v421 = vunpack.c.l.b16 %v130
    %v422 = vunpack.c.l.b16 %v131
    %v423 = vunpack.c.l.b16 %v132
    %v424 = vunpack.c.l.b16 %v133
    %v425 = vunpack.c.l.b16 %v134
    %v426 = vunpack.c.l.b16 %v135
    %v427 = vunpack.c.l.b16 %v136
    %v428 = vunpack.c.l.b16 %v137
    %v429 = vunpack.c.l.b16 %v138
    %v430 = vunpack.c.l.b16 %v139
    %v431 = vunpack.c.l.b16 %v140
    %v432 = vunpack.c.l.b16 %v141
    %v433 = vunpack.c.l.b16 %v142
    %v434 = vunpack.c.l.b16 %v143
    %v435 = vunpack.c.l.b16 %v144
    %v436 = vunpack.c.l.b16 %v145
    %v437 = vunpack.c.l.b16 %v146
    %v438 = vunpack.c.l.b16 %v147
    %v439 = vunpack.c.l.b16 %v148
    %v440 = vunpack.c.l.b16 %v149
    %v441 = vunpack.c.l.b16 %v150
    %v442 = vunpack.c.l.b16 %v151
    %v443 = vunpack.c.l.b16 %v152
    %v444 = vunpack.c.l.b16 %v153
    %v445 = vpack.c.b16 %v318, %v317
    %v446 = vpack.c.b16 %v320, %v319
    %v447 = vpack.c.b16 %v322, %v321
    %v448 = vpack.c.b16 %v324, %v323
    %v449 = vpack.c.b16 %v326, %v325
    %v450 = vpack.c.b16 %v328, %v327
    %v451 = vpack.c.b16 %v330, %v329
    %v452 = vpack.c.b16 %v332, %v331
    %v453 = vpack.c.b16 %v334, %v333
    %v454 = vpack.c.b16 %v336, %v335
    %v455 = vpack.c.b16 %v338, %v337
    %v456 = vpack.c.b16 %v340, %v339
    %v457 = vpack.c.b16 %v342, %v341
    %v458 = vpack.c.b16 %v344, %v343
    %v459 = vpack.c.b16 %v346, %v345
    %v460 = vpack.c.b16 %v348, %v347
    %v461 = vpack.c.b16 %v350, %v349
    %v462 = vpack.c.b16 %v352, %v351
    %v463 = vpack.c.b16 %v354, %v353
    %v464 = vpack.c.b16 %v356, %v355
    %v465 = vpack.c.b16 %v358, %v357
    %v466 = vpack.c.b16 %v360, %v359
    %v467 = vpack.c.b16 %v362, %v361
    %v468 = vpack.c.b16 %v364, %v363
    %v469 = vpack.c.b16 %v366, %v365
    %v470 = vpack.c.b16 %v368, %v367
    %v471 = vpack.c.b16 %v370, %v369
    %v472 = vpack.c.b16 %v372, %v371
    %v473 = vpack.c.b16 %v374, %v373
    %v474 = vpack.c.b16 %v376, %v375
    %v475 = vpack.c.b16 %v378, %v377
    %v476 = vpack.c.b16 %v380, %v379
    %v477 = vpack.c.b16 %v382, %v381
    %v478 = vpack.c.b16 %v384, %v383
    %v479 = vpack.c.b16 %v386, %v385
    %v480 = vpack.c.b16 %v388, %v387
    %v481 = vpack.c.b16 %v390, %v389
    %v482 = vpack.c.b16 %v392, %v391
    %v483 = vpack.c.b16 %v394, %v393
    %v484 = vpack.c.b16 %v396, %v395
    %v485 = vpack.c.b16 %v398, %v397
    %v486 = vpack.c.b16 %v400, %v399
    %v487 = vpack.c.b16 %v402, %v401
    %v488 = vpack.c.b16 %v404, %v403
    %v489 = vpack.c.b16 %v406, %v405
    %v490 = vpack.c.b16 %v408, %v407
    %v491 = vpack.c.b16 %v410, %v409
    %v492 = vpack.c.b16 %v412, %v411
    %v493 = vpack.c.b16 %v414, %v413
    %v494 = vpack.c.b16 %v416, %v415
    %v495 = vpack.c.b16 %v418, %v417
    %v496 = vpack.c.b16 %v420, %v419
    %v497 = vpack.c.b16 %v422, %v421
    %v498 = vpack.c.b16 %v424, %v423
    %v499 = vpack.c.b16 %v426, %v425
    %v500 = vpack.c.b16 %v428, %v427
    %v501 = vpack.c.b16 %v430, %v429
    %v502 = vpack.c.b16 %v432, %v431
    %v503 = vpack.c.b16 %v434, %v433
    %v504 = vpack.c.b16 %v436, %v435
    %v505 = vpack.c.b16 %v438, %v437
    %v506 = vpack.c.b16 %v440, %v439
    %v507 = vpack.c.b16 %v442, %v441
    %v508 = vpack.c.b16 %v444, %v443
    %573 = vmatprep.subr.bf16.mxu0 0
    %574 = vmatpush1.bf16.msra.mxu0 %v445
    %575 = vmatprep.subr.bf16.mxu0 0
    %576 = vmatpush1.bf16.msra.mxu0 %v446
    %577 = vmatprep.subr.bf16.mxu0 0
    %578 = vmatpush1.bf16.msra.mxu0 %v447
    %579 = vmatprep.subr.bf16.mxu0 0
    %580 = vmatpush1.bf16.msra.mxu0 %v448
    %581 = vmatprep.subr.bf16.mxu0 0
    %582 = vmatpush1.bf16.msra.mxu0 %v449
    %583 = vmatprep.subr.bf16.mxu0 0
    %584 = vmatpush1.bf16.msra.mxu0 %v450
    %585 = vmatprep.subr.bf16.mxu0 0
    %586 = vmatpush1.bf16.msra.mxu0 %v451
    %587 = vmatprep.subr.bf16.mxu0 0
    %588 = vmatpush1.bf16.msra.mxu0 %v452
    %589 = vmatprep.subr.bf16.mxu0 0
    %590 = vmatpush1.bf16.msra.mxu0 %v453
    %591 = vmatprep.subr.bf16.mxu0 0
    %592 = vmatpush1.bf16.msra.mxu0 %v454
    %593 = vmatprep.subr.bf16.mxu0 0
    %594 = vmatpush1.bf16.msra.mxu0 %v455
    %595 = vmatprep.subr.bf16.mxu0 0
    %596 = vmatpush1.bf16.msra.mxu0 %v456
    %597 = vmatprep.subr.bf16.mxu0 0
    %598 = vmatpush1.bf16.msra.mxu0 %v457
    %599 = vmatprep.subr.bf16.mxu0 0
    %600 = vmatpush1.bf16.msra.mxu0 %v458
    %601 = vmatprep.subr.bf16.mxu0 0
    %602 = vmatpush1.bf16.msra.mxu0 %v459
    %603 = vmatprep.subr.bf16.mxu0 0
    %604 = vmatpush1.bf16.msra.mxu0 %v460
    %605 = vmatprep.mubr.bf16.mxu0 %v174
    %606 = vmatmul.mubr.bf16.gmra.mrb[0].mxu0 %v173
    %v607 = vpop.f32.mrb[0].mxu0
    %v608 = vadd.f32 %v159, %v607
    %v609 = vpop.f32.mrb[0].mxu0
    %v610 = vpop.f32.mrb[0].mxu0
    %v611 = vpop.f32.mrb[0].mxu0
    %612 = vdwg.mxu0
    %613 = vmatprep.subr.bf16.mxu0 0
    %614 = vmatpush1.bf16.msra.mxu0 %v461
    %615 = vmatprep.subr.bf16.mxu0 0
    %616 = vmatpush1.bf16.msra.mxu0 %v462
    %617 = vmatprep.subr.bf16.mxu0 0
    %618 = vmatpush1.bf16.msra.mxu0 %v463
    %619 = vmatprep.subr.bf16.mxu0 0
    %620 = vmatpush1.bf16.msra.mxu0 %v464
    %621 = vmatprep.subr.bf16.mxu0 0
    %622 = vmatpush1.bf16.msra.mxu0 %v465
    %623 = vmatprep.subr.bf16.mxu0 0
    %624 = vmatpush1.bf16.msra.mxu0 %v466
    %625 = vmatprep.subr.bf16.mxu0 0
    %626 = vmatpush1.bf16.msra.mxu0 %v467
    %627 = vmatprep.subr.bf16.mxu0 0
    %628 = vmatpush1.bf16.msra.mxu0 %v468
    %629 = vmatprep.subr.bf16.mxu0 0
    %630 = vmatpush1.bf16.msra.mxu0 %v469
    %631 = vmatprep.subr.bf16.mxu0 0
    %632 = vmatpush1.bf16.msra.mxu0 %v470
    %633 = vmatprep.subr.bf16.mxu0 0
    %634 = vmatpush1.bf16.msra.mxu0 %v471
    %635 = vmatprep.subr.bf16.mxu0 0
    %636 = vmatpush1.bf16.msra.mxu0 %v472
    %637 = vmatprep.subr.bf16.mxu0 0
    %638 = vmatpush1.bf16.msra.mxu0 %v473
    %639 = vmatprep.subr.bf16.mxu0 0
    %640 = vmatpush1.bf16.msra.mxu0 %v474
    %641 = vmatprep.subr.bf16.mxu0 0
    %642 = vmatpush1.bf16.msra.mxu0 %v475
    %643 = vmatprep.subr.bf16.mxu0 0
    %644 = vmatpush1.bf16.msra.mxu0 %v476
    %645 = vmatprep.mubr.bf16.mxu0 %v176
    %646 = vmatmul.mubr.bf16.gmra.mrb[0].mxu0 %v175
    %v647 = vpop.f32.mrb[0].mxu0
    %v648 = vadd.f32 %v608, %v647
    %v649 = vpop.f32.mrb[0].mxu0
    %v650 = vpop.f32.mrb[0].mxu0
    %v651 = vpop.f32.mrb[0].mxu0
    %652 = vdwg.mxu0
    %653 = vmatprep.subr.bf16.mxu0 0
    %654 = vmatpush1.bf16.msra.mxu0 %v477
    %655 = vmatprep.subr.bf16.mxu0 0
    %656 = vmatpush1.bf16.msra.mxu0 %v478
    %657 = vmatprep.subr.bf16.mxu0 0
    %658 = vmatpush1.bf16.msra.mxu0 %v479
    %659 = vmatprep.subr.bf16.mxu0 0
    %660 = vmatpush1.bf16.msra.mxu0 %v480
    %661 = vmatprep.subr.bf16.mxu0 0
    %662 = vmatpush1.bf16.msra.mxu0 %v481
    %663 = vmatprep.subr.bf16.mxu0 0
    %664 = vmatpush1.bf16.msra.mxu0 %v482
    %665 = vmatprep.subr.bf16.mxu0 0
    %666 = vmatpush1.bf16.msra.mxu0 %v483
    %667 = vmatprep.subr.bf16.mxu0 0
    %668 = vmatpush1.bf16.msra.mxu0 %v484
    %669 = vmatprep.subr.bf16.mxu0 0
    %670 = vmatpush1.bf16.msra.mxu0 %v485
    %671 = vmatprep.subr.bf16.mxu0 0
    %672 = vmatpush1.bf16.msra.mxu0 %v486
    %673 = vmatprep.subr.bf16.mxu0 0
    %674 = vmatpush1.bf16.msra.mxu0 %v487
    %675 = vmatprep.subr.bf16.mxu0 0
    %676 = vmatpush1.bf16.msra.mxu0 %v488
    %677 = vmatprep.subr.bf16.mxu0 0
    %678 = vmatpush1.bf16.msra.mxu0 %v489
    %679 = vmatprep.subr.bf16.mxu0 0
    %680 = vmatpush1.bf16.msra.mxu0 %v490
    %681 = vmatprep.subr.bf16.mxu0 0
    %682 = vmatpush1.bf16.msra.mxu0 %v491
    %683 = vmatprep.subr.bf16.mxu0 0
    %684 = vmatpush1.bf16.msra.mxu0 %v492
    %685 = vmatprep.mubr.bf16.mxu0 %v178
    %686 = vmatmul.mubr.bf16.gmra.mrb[0].mxu0 %v177
    %v687 = vpop.f32.mrb[0].mxu0
    %v688 = vadd.f32 %v648, %v687
    %v689 = vpop.f32.mrb[0].mxu0
    %v690 = vpop.f32.mrb[0].mxu0
    %v691 = vpop.f32.mrb[0].mxu0
    %692 = vdwg.mxu0
    %693 = vmatprep.subr.bf16.mxu0 0
    %694 = vmatpush1.bf16.msra.mxu0 %v493
    %695 = vmatprep.subr.bf16.mxu0 0
    %696 = vmatpush1.bf16.msra.mxu0 %v494
    %697 = vmatprep.subr.bf16.mxu0 0
    %698 = vmatpush1.bf16.msra.mxu0 %v495
    %699 = vmatprep.subr.bf16.mxu0 0
    %700 = vmatpush1.bf16.msra.mxu0 %v496
    %701 = vmatprep.subr.bf16.mxu0 0
    %702 = vmatpush1.bf16.msra.mxu0 %v497
    %703 = vmatprep.subr.bf16.mxu0 0
    %704 = vmatpush1.bf16.msra.mxu0 %v498
    %705 = vmatprep.subr.bf16.mxu0 0
    %706 = vmatpush1.bf16.msra.mxu0 %v499
    %707 = vmatprep.subr.bf16.mxu0 0
    %708 = vmatpush1.bf16.msra.mxu0 %v500
    %709 = vmatprep.subr.bf16.mxu0 0
    %710 = vmatpush1.bf16.msra.mxu0 %v501
    %711 = vmatprep.subr.bf16.mxu0 0
    %712 = vmatpush1.bf16.msra.mxu0 %v502
    %713 = vmatprep.subr.bf16.mxu0 0
    %714 = vmatpush1.bf16.msra.mxu0 %v503
    %715 = vmatprep.subr.bf16.mxu0 0
    %716 = vmatpush1.bf16.msra.mxu0 %v504
    %717 = vmatprep.subr.bf16.mxu0 0
    %718 = vmatpush1.bf16.msra.mxu0 %v505
    %719 = vmatprep.subr.bf16.mxu0 0
    %720 = vmatpush1.bf16.msra.mxu0 %v506
    %721 = vmatprep.subr.bf16.mxu0 0
    %722 = vmatpush1.bf16.msra.mxu0 %v507
    %723 = vmatprep.subr.bf16.mxu0 0
    %724 = vmatpush1.bf16.msra.mxu0 %v508
    %725 = vmatprep.mubr.bf16.mxu0 %v180
    %726 = vmatmul.mubr.bf16.gmra.mrb[0].mxu0 %v179
    %v727 = vpop.f32.mrb[0].mxu0
    %v728 = vadd.f32 %v688, %v727
    %v729 = vpop.f32.mrb[0].mxu0
    %v730 = vpop.f32.mrb[0].mxu0
    %v731 = vpop.f32.mrb[0].mxu0
    %732 = vdwg.mxu0
    %v733 = vmax.f32 %v728, 0.0
    %v734 = vld [vmem:[%s3] sm:$0xff]
    %v735 = vld [vmem:[%s3 + $0x8] sm:$0xff]
    %v736 = vld [vmem:[%s3 + $0x10] sm:$0xff]
    %v737 = vld [vmem:[%s3 + $0x18] sm:$0xff]
    %v738 = vld [vmem:[%s4] sm:$0x1]
    %v740 = vlaneseq
    %v741 = vshrl.u32 %v740, 7
    %v742 = vsub.s32 0, %v741
    %v743 = vrot.slane %v738, %v742
    %vm745 = vcmask 261120
    %v747 = vsel %vm745, %v733, 0
    %749 = vmatprep.subr.mxu0 0.0
    %750 = vmatpush1.msra.mxu0 %v734
    %751 = vmatprep.subr.mxu0 0.0
    %752 = vmatpush1.msra.mxu0 %v735
    %753 = vmatprep.subr.mxu0 0.0
    %754 = vmatpush1.msra.mxu0 %v736
    %755 = vmatprep.subr.mxu0 0.0
    %756 = vmatpush1.msra.mxu0 %v737
    %757 = vmatprep.subr.mxu0 0.0
    %758 = vmatpush1.msra.mxu0 0.0
    %759 = vmatprep.subr.mxu0 0.0
    %760 = vmatpush1.msra.mxu0 0.0
    %761 = vmatprep.subr.mxu0 0.0
    %762 = vmatpush1.msra.mxu0 0.0
    %763 = vmatprep.subr.mxu0 0.0
    %764 = vmatpush1.msra.mxu0 0.0
    %765 = vmatprep.subr.mxu0 0.0
    %766 = vmatpush1.msra.mxu0 0.0
    %767 = vmatprep.subr.mxu0 0.0
    %768 = vmatpush1.msra.mxu0 0.0
    %769 = vmatprep.subr.mxu0 0.0
    %770 = vmatpush1.msra.mxu0 0.0
    %771 = vmatprep.subr.mxu0 0.0
    %772 = vmatpush1.msra.mxu0 0.0
    %773 = vmatprep.subr.mxu0 0.0
    %774 = vmatpush1.msra.mxu0 0.0
    %775 = vmatprep.subr.mxu0 0.0
    %776 = vmatpush1.msra.mxu0 0.0
    %777 = vmatprep.subr.mxu0 0.0
    %778 = vmatpush1.msra.mxu0 0.0
    %779 = vmatprep.subr.mxu0 0.0
    %780 = vmatpush1.msra.mxu0 0.0
    %781 = vmatprep.subr.mxu0 0.0
    %782 = vmatpush1.msra.mxu0 0.0
    %783 = vmatprep.subr.mxu0 0.0
    %784 = vmatpush1.msra.mxu0 0.0
    %785 = vmatprep.subr.mxu0 0.0
    %786 = vmatpush1.msra.mxu0 0.0
    %787 = vmatprep.subr.mxu0 0.0
    %788 = vmatpush1.msra.mxu0 0.0
    %789 = vmatprep.subr.mxu0 0.0
    %790 = vmatpush1.msra.mxu0 0.0
    %791 = vmatprep.subr.mxu0 0.0
    %792 = vmatpush1.msra.mxu0 0.0
    %793 = vmatprep.subr.mxu0 0.0
    %794 = vmatpush1.msra.mxu0 0.0
    %795 = vmatprep.subr.mxu0 0.0
    %796 = vmatpush1.msra.mxu0 0.0
    %797 = vmatprep.subr.mxu0 0.0
    %798 = vmatpush1.msra.mxu0 0.0
    %799 = vmatprep.subr.mxu0 0.0
    %800 = vmatpush1.msra.mxu0 0.0
    %801 = vmatprep.subr.mxu0 0.0
    %802 = vmatpush1.msra.mxu0 0.0
    %803 = vmatprep.subr.mxu0 0.0
    %804 = vmatpush1.msra.mxu0 0.0
    %805 = vmatprep.subr.mxu0 0.0
    %806 = vmatpush1.msra.mxu0 0.0
    %807 = vmatprep.subr.mxu0 0.0
    %808 = vmatpush1.msra.mxu0 0.0
    %809 = vmatprep.subr.mxu0 0.0
    %810 = vmatpush1.msra.mxu0 0.0
    %811 = vmatprep.subr.mxu0 0.0
    %812 = vmatpush1.msra.mxu0 0.0
    %813 = vmatprep.mubr.f32.mxu0 0.0
    %814 = vmatmul.mubr.f32.gmra.mrb[0].mxu0 %v747
    %v815 = vpop.f32.mrb[0].mxu0
    %v816 = vadd.f32 %v743, %v815
    %v817 = vpop.f32.mrb[0].mxu0
    %818 = vdwg.mxu0
    %v819 = vsub.f32 0.0, %v816
    %v820 = vmul.f32 %v819, 1.442695
    %v821 = vpow.pop %v820
    %v822 = vadd.f32 %v821, 1.0
    %v823 = vrcp.pop %v822
    %v824 = vmul.f32 1.0, %v823
    %v825 = vmul.f32 %v824, 1.442695
    %v826 = vpow.pop %v825
    %vm827 = vcmask 130048
    %v828 = vsel %vm827, %v826, 0.0
    %829 = vadd.xlane.f32.xlu0 %v828
    %v830 = vpop.xlane.xlu0 %829
    %v831 = vrcp.pop %v830
    %v832 = vmul.f32 %v826, %v831
    %833 = vst.msk [vmem:[#allocation2] sm:$0xff] %vm827, %v824
    %835 = vrot.lane.b32.xlu0 %v832, 16
    %v836 = vpop.permute.xlu0 %835
    %vm838 = vcmask 261248
    %839 = vst.msk [vmem:[#allocation2] sm:$0xff] %vm838, %v836
    %841 = vrot.lane.b32.xlu0 %v816, 32
    %v842 = vpop.permute.xlu0 %841
    %vm844 = vcmask 392448
    %845 = vst.msk [vmem:[#allocation2] sm:$0xff] %vm844, %v842
    // Predicated region
    $region22: #{tpu_custom_call.1} parent=1 // pred_check
      _
    $region23: #{tpu_custom_call.1} parent=1 // pred_check_branch
      %847 = sbr.rel (0) target = $region25
    $region24: #{tpu_custom_call.1} parent=1 // pred_region
      %s849 = ssub.s32 128, 128
      %850 = vsyncadd [#allocation3], %s849
      %s852 = sshll.u32 [#allocation2], 4
      %s853 = int_to_ptr.vmem [resolvable:$true] %s852
      %855 = dma.vmem_to_hbm [thread:$0]  %s853, 128, %s5, [#allocation3]
    $region25: #{tpu_custom_call.1} parent=1 // pred_fallthru
      _
    // Predicated region
    $region26: #{tpu_custom_call.1} parent=1 // pred_check
      _
    $region27: #{tpu_custom_call.1} parent=1 // pred_check_branch
      %857 = sbr.rel (0) target = $region29
    $region28: #{tpu_custom_call.1} parent=1 // pred_region
      %858 = dma.done [#allocation3], 128
    $region29: #{tpu_custom_call.1} parent=1 // pred_fallthru
      _
    %859 = vsyncpa [#allocation3], 1

</llo_original>
